<compile_context>
chip_gen: v7x
topology: tpu7x:2x2x1
jax: 0.10.0
libtpu: 0.0.40
codegen_flags: <defaults>
</compile_context>

<pallas_src>
import math

import jax
import jax.numpy as jnp
from jax.experimental import pallas as pl
from jax.experimental.pallas import tpu as pltpu


_LANES = 128
# Conservative per-step tile budget (double-buffered in + out) that also fits
# v7x's 64 MiB physical VMEM with plenty of headroom.
_VMEM_TILE_BUDGET_BYTES = 24 << 20


def _scaler_kernel(x_ref, scale_ref, bias_ref, o_ref):
    # x_ref:     (TN, TF) tile of the (row-folded) input
    # scale_ref: (1,  TF) float32, broadcast over rows (sublane broadcast)
    # bias_ref:  (1,  TF) float32, broadcast over rows
    # o = x * scale + bias  ==  ((x - mins) / ranges) * 2 - 1
    x = x_ref[...].astype(jnp.float32)
    y = x * scale_ref[...] + bias_ref[...]
    o_ref[...] = y.astype(o_ref.dtype)


def _sublane_multiple(itemsize: int) -> int:
    # Packed sublane layout: f32 -> 8 rows/vreg, bf16 -> 16, int8/fp8 -> 32.
    return max(8, 32 // max(int(itemsize), 1))


def _pick_col_tile(n_cols: int, itemsize: int, sub: int) -> int:
    """Full width unless even one sublane-multiple row strip busts the budget."""
    strip_bytes = 4 * sub * n_cols * itemsize        # dbl-buffered in + out strip
    if strip_bytes <= _VMEM_TILE_BUDGET_BYTES or n_cols % _LANES != 0:
        return n_cols                                # full-dim block is always legal
    max_cols = _VMEM_TILE_BUDGET_BYTES // max(4 * sub * itemsize, 1)
    tf = max(_LANES, (max_cols // _LANES) * _LANES)  # round down to lane multiple
    return min(tf, n_cols)


def _pick_row_tile(n_rows: int, n_cols_tile: int, itemsize: int, sub: int) -> int:
    # Per grid step: double-buffered input tile + double-buffered output tile.
    bytes_per_row = 4 * n_cols_tile * itemsize
    max_rows = max(sub, _VMEM_TILE_BUDGET_BYTES // max(bytes_per_row, 1))
    if n_rows <= max_rows:
        # Whole row extent fits in one step; if it's big enough, split into two
        # balanced steps so the parallel grid axis can shard across the two
        # TensorCores of a v7x chip (no effect on v5e/v6e).
        if n_rows >= 2 * sub:
            half = -(-n_rows // 2)             # ceil(n_rows / 2)
            return -(-half // sub) * sub       # round up to sublane multiple
        return n_rows                          # full-dim block is always legal
    return max(sub, (max_rows // sub) * sub)   # round down to sublane multiple


def scaler_forward(x, mins, maxs):
    """Min-max scale x ([..., F]) to [-1, 1] using per-feature mins/maxs ([F])."""
    x = jnp.asarray(x)
    assert x.ndim >= 1, "expected at least one (feature) dimension"
    F = x.shape[-1]
    lead_shape = x.shape[:-1]
    N = int(math.prod(lead_shape)) if lead_shape else 1

    # Affine params in float32 (avoids precision loss if x is bf16).
    # TODO(synk): maxs == mins gives inf/nan scale, same as the PyTorch module.
    mins_f = jnp.asarray(mins, jnp.float32).reshape(-1)
    maxs_f = jnp.asarray(maxs, jnp.float32).reshape(-1)
    ranges_f = maxs_f - mins_f
    scale = 2.0 / ranges_f
    bias = -2.0 * mins_f / ranges_f - 1.0

    # Lane-dense packing: fold k consecutive rows into one kernel row so the
    # last (lane) dim is a multiple of 128 -> unmasked, full-lane stores.
    k = 1
    if F % _LANES != 0:
        k_cand = math.lcm(F, _LANES) // F
        if k_cand > 0 and N % k_cand == 0:
            k = k_cand
    Np, Fp = N // k, F * k

    x2 = x.reshape(Np, Fp)
    scale2 = jnp.tile(scale, k).reshape(1, Fp)   # params repeat every F lanes
    bias2 = jnp.tile(bias, k).reshape(1, Fp)

    itemsize = jnp.dtype(x.dtype).itemsize
    sub = _sublane_multiple(itemsize)
    tf = _pick_col_tile(Fp, itemsize, sub)
    tn = _pick_row_tile(Np, tf, itemsize, sub)
    grid = (pl.cdiv(Np, tn), pl.cdiv(Fp, tf))

    # Scoped VMEM: double-buffered in + out tiles, two f32 param rows, slack.
    vmem_bytes = 2 * 2 * tn * tf * itemsize + 4 * 2 * tf * 4 + (1 << 20)
    vmem_bytes = int(min(max(vmem_bytes, 4 << 20), 48 << 20))

    out2 = pl.pallas_call(
        _scaler_kernel,
        out_shape=jax.ShapeDtypeStruct((Np, Fp), x.dtype),
        grid_spec=pltpu.PrefetchScalarGridSpec(
            num_scalar_prefetch=0,
            grid=grid,
            in_specs=[
                pl.BlockSpec((tn, tf), lambda i, j: (i, j)),   # x tile
                pl.BlockSpec((1, tf), lambda i, j: (0, j)),    # scale (row-invariant)
                pl.BlockSpec((1, tf), lambda i, j: (0, j)),    # bias  (row-invariant)
            ],
            out_specs=pl.BlockSpec((tn, tf), lambda i, j: (i, j)),
        ),
        compiler_params=pltpu.CompilerParams(
            dimension_semantics=("parallel", "parallel"),
            vmem_limit_bytes=vmem_bytes,
        ),
    )(x2, scale2, bias2)

    return out2.reshape(x.shape)


if __name__ == "__main__":
    key = jax.random.PRNGKey(0)
    kx, _ = jax.random.split(key)

    N, F = 16, 32  # small shapes: 16 samples, 32 features

    # Deterministic per-feature mins / maxs (what the module __init__ would get).
    mins = jnp.linspace(-1.0, 1.0, F, dtype=jnp.float32)
    maxs = mins + jnp.linspace(1.0, 3.0, F, dtype=jnp.float32)  # strictly > mins

    # Inputs drawn roughly inside [mins, maxs] (scaler works for any values).
    x = mins + (maxs - mins) * jax.random.uniform(kx, (N, F), dtype=jnp.float32)

    out = scaler_forward(x, mins, maxs)
    out = jax.block_until_ready(out)

    # Reference check in plain JAX (same math as the PyTorch module).
    ref = ((x - mins) / (maxs - mins)) * 2.0 - 1.0
    assert out.shape == (N, F)
    assert jnp.allclose(out, ref, atol=1e-5, rtol=1e-5)

    print("KERNEL_OK")
</pallas_src>

<mosaic_0001>
module attributes {stable_mosaic.version = 11 : i64} {
  func.func @_scaler_kernel(%arg0: i32, %arg1: i32, %arg2: memref<4x128xf32, #tpu.memory_space<vmem>>, %arg3: memref<1x128xf32, #tpu.memory_space<vmem>>, %arg4: memref<1x128xf32, #tpu.memory_space<vmem>>, %arg5: memref<4x128xf32, #tpu.memory_space<vmem>>) attributes {dimension_semantics = [#tpu.dimension_semantics<parallel>, #tpu.dimension_semantics<parallel>], iteration_bounds = array<i64: 1, 1>, scalar_prefetch = 0 : i64, scratch_operands = 0 : i64, tpu.core_type = #tpu.core_type<tc>, window_params = [{transform_indices = @transform_0, window_bounds = array<i64: 4, 128>}, {transform_indices = @transform_1, window_bounds = array<i64: 1, 128>}, {transform_indices = @transform_2, window_bounds = array<i64: 1, 128>}, {transform_indices = @transform_3, window_bounds = array<i64: 4, 128>}]} {
    %c0 = arith.constant 0 : index
    %c0_0 = arith.constant 0 : index
    %0 = vector.load %arg2[%c0, %c0_0] : memref<4x128xf32, #tpu.memory_space<vmem>>, vector<4x128xf32>
    %c0_1 = arith.constant 0 : index
    %c0_2 = arith.constant 0 : index
    %1 = vector.load %arg3[%c0_1, %c0_2] : memref<1x128xf32, #tpu.memory_space<vmem>>, vector<1x128xf32>
    %2 = vector.broadcast %1 : vector<1x128xf32> to vector<4x128xf32>
    %3 = arith.mulf %0, %2 : vector<4x128xf32>
    %c0_3 = arith.constant 0 : index
    %c0_4 = arith.constant 0 : index
    %4 = vector.load %arg4[%c0_3, %c0_4] : memref<1x128xf32, #tpu.memory_space<vmem>>, vector<1x128xf32>
    %5 = vector.broadcast %4 : vector<1x128xf32> to vector<4x128xf32>
    %6 = arith.addf %3, %5 : vector<4x128xf32>
    %c0_5 = arith.constant 0 : index
    %c0_6 = arith.constant 0 : index
    %7 = vector.load %arg5[%c0_5, %c0_6] : memref<4x128xf32, #tpu.memory_space<vmem>>, vector<4x128xf32>
    tpu.vector_store %arg5[%c0_5, %c0_6], %6 {strides = array<i32>} : memref<4x128xf32, #tpu.memory_space<vmem>>, vector<4x128xf32>,
    return
  }
  func.func @transform_0(%arg0: i32, %arg1: i32) -> (i32, i32) {
    %c0_i32 = arith.constant 0 : i32
    return %arg0, %arg1 : i32, i32
  }
  func.func @transform_1(%arg0: i32, %arg1: i32) -> (i32, i32) {
    %c0_i32 = arith.constant 0 : i32
    %c0_i32_0 = arith.constant 0 : i32
    return %c0_i32, %arg1 : i32, i32
  }
  func.func @transform_2(%arg0: i32, %arg1: i32) -> (i32, i32) {
    %c0_i32 = arith.constant 0 : i32
    %c0_i32_0 = arith.constant 0 : i32
    return %c0_i32, %arg1 : i32, i32
  }
  func.func @transform_3(%arg0: i32, %arg1: i32) -> (i32, i32) {
    %c0_i32 = arith.constant 0 : i32
    return %arg0, %arg1 : i32, i32
  }
}

</mosaic_0001>

<llo_original>
// kernel: tpu_custom_call.1
$region0: #{tpu_custom_call.1}
  #allocation0 [shape = 'u32[]', space=smem, size = 0x4, offset = 0x4, fixed_abs, tag = 'smem constant byte address 0x4 - core index']
  #allocation1 [shape = 'u32[144,128]{1,0:T(1,128)}', space=vmem, size = 0x12000, scoped, tag = 'internal scratch']
  %s0 = inlined_call_operand.hbm [shape: f32[4,128], index: 0, kind: input, shape index: {}]
  %s1 = inlined_call_operand.vmem [shape: f32[1,128], index: 1, kind: input, shape index: {}]
  %s2 = inlined_call_operand.vmem [shape: f32[1,128], index: 2, kind: input, shape index: {}]
  %s3 = inlined_call_operand.hbm [shape: f32[4,128], index: 3, kind: output, shape index: {}]
  %s4 = sld [smem:[#allocation0]]
  $region26: #{tpu_custom_call.1} parent=0
    _
  %s6 = ssub.s32 1, %s4
  %s7 = scalar_select 0, %s6, %s4
  $region1: #{tpu_custom_call.1} parent=0
    #allocation2 [shape = 'u8[2048]{0}', space=vmem, size = 0x800, scoped, tag = 'input window, operand 0, single buffered']
    #allocation3 [shape = 's32[1]{0}', space=sflag, size = 0x4, scoped, tag = 'scoped memory for tpu_custom_call.1']
    #allocation4 [shape = 's32[1]{0}', space=sflag, size = 0x4, scoped, tag = 'scoped memory for tpu_custom_call.1']
    #allocation5 [shape = 'u8[2048]{0}', space=vmem, size = 0x800, scoped, tag = 'output window, operand 0, single buffered']
    %8 = vsyncpa [#allocation3], 0
    %9 = vsyncpa [#allocation4], 0
    // Predicated region
    $region2: #{tpu_custom_call.1} parent=1 // pred_check
      _
    $region3: #{tpu_custom_call.1} parent=1 // pred_check_branch
      %11 = sbr.rel (0) target = $region5
    $region4: #{tpu_custom_call.1} parent=1 // pred_region
      %s13 = ssub.s32 64, 64
      %14 = vsyncadd [#allocation3], %s13
      %s16 = sshll.u32 [#allocation2], 4
      %s17 = int_to_ptr.vmem [resolvable:$true] %s16
      %19 = dma.hbm_to_vmem [thread:$0]  %s0, 64, %s17, [#allocation3]
    $region5: #{tpu_custom_call.1} parent=1 // pred_fallthru
      _
    // Predicated region
    $region6: #{tpu_custom_call.1} parent=1 // pred_check
      _
    $region7: #{tpu_custom_call.1} parent=1 // pred_check_branch
      %21 = sbr.rel (0) target = $region9
    $region8: #{tpu_custom_call.1} parent=1 // pred_region
      _
    $region9: #{tpu_custom_call.1} parent=1 // pred_fallthru
      _
    // Predicated region
    $region10: #{tpu_custom_call.1} parent=1 // pred_check
      _
    $region11: #{tpu_custom_call.1} parent=1 // pred_check_branch
      %23 = sbr.rel (0) target = $region13
    $region12: #{tpu_custom_call.1} parent=1 // pred_region
      _
    $region13: #{tpu_custom_call.1} parent=1 // pred_fallthru
      _
    // Predicated region
    $region14: #{tpu_custom_call.1} parent=1 // pred_check
      _
    $region15: #{tpu_custom_call.1} parent=1 // pred_check_branch
      %25 = sbr.rel (0) target = $region17
    $region16: #{tpu_custom_call.1} parent=1 // pred_region
      %26 = dma.done [#allocation3], 64
    $region17: #{tpu_custom_call.1} parent=1 // pred_fallthru
      _
    %v27 = vld [vmem:[#allocation2] sm:$0xf]
    %v28 = vld [vmem:[%s1] sm:$0x1]
    %v30 = vlaneseq
    %v31 = vshrl.u32 %v30, 7
    %v32 = vsub.s32 0, %v31
    %v33 = vrot.slane %v28, %v32
    %v35 = vmul.f32 %v27, %v33
    %v36 = vld [vmem:[%s2] sm:$0x1]
    %v38 = vlaneseq
    %v39 = vshrl.u32 %v38, 7
    %v40 = vsub.s32 0, %v39
    %v41 = vrot.slane %v36, %v40
    %v43 = vadd.f32 %v35, %v41
    %44 = vst [vmem:[#allocation5] sm:$0xf] %v43
    // Predicated region
    $region18: #{tpu_custom_call.1} parent=1 // pred_check
      _
    $region19: #{tpu_custom_call.1} parent=1 // pred_check_branch
      %46 = sbr.rel (0) target = $region21
    $region20: #{tpu_custom_call.1} parent=1 // pred_region
      %s48 = ssub.s32 64, 64
      %49 = vsyncadd [#allocation4], %s48
      %s51 = sshll.u32 [#allocation5], 4
      %s52 = int_to_ptr.vmem [resolvable:$true] %s51
      %54 = dma.vmem_to_hbm [thread:$0]  %s52, 64, %s3, [#allocation4]
    $region21: #{tpu_custom_call.1} parent=1 // pred_fallthru
      _
    // Predicated region
    $region22: #{tpu_custom_call.1} parent=1 // pred_check
      _
    $region23: #{tpu_custom_call.1} parent=1 // pred_check_branch
      %56 = sbr.rel (0) target = $region25
    $region24: #{tpu_custom_call.1} parent=1 // pred_region
      %57 = dma.done [#allocation4], 64
    $region25: #{tpu_custom_call.1} parent=1 // pred_fallthru
      _
    %58 = vsyncpa [#allocation3], 1
    %59 = vsyncpa [#allocation4], 1

</llo_original>
